<compile_context>
chip_gen: v7x
topology: tpu7x:2x2x1
jax: 0.10.0
libtpu: 0.0.40
codegen_flags: <defaults>
</compile_context>

<pallas_src>
import functools

import jax
import jax.numpy as jnp
from jax import lax
from jax.experimental import pallas as pl
from jax.experimental.pallas import tpu as pltpu


# ----------------------------------------------------------------------------
# Fused pooling + MLP + sigmoid kernel
# ----------------------------------------------------------------------------
def _channel_attention_kernel(x_ref, w1_ref, w2_ref, o_ref,
                              sum_acc, max_acc, *, S, bs, needs_mask):
    """Grid = (N, S_tiles): axis 0 parallel over batch, axis 1 spatial reduction.

    x_ref : (1, C, bs)   NCHW view tile, spatial on the lane dim
    w1_ref: (C, Cr)      fc[0].weight^T
    w2_ref: (Cr, C)      fc[2].weight^T
    o_ref : (1, 1, C)    sigmoid(fc(avg) + fc(max)) for this sample
    """
    s_idx = pl.program_id(1)
    n_s = pl.num_programs(1)

    @pl.when(s_idx == 0)
    def _init():
        sum_acc[...] = jnp.zeros_like(sum_acc)
        max_acc[...] = jnp.full_like(max_acc, -jnp.inf)

    x = x_ref[...].astype(jnp.float32)                       # (1, C, bs)

    if needs_mask:
        # Only the last spatial tile has an invalid tail (no zero-pad anymore),
        # so only that tile pays for the iota/compare/select.
        is_last = s_idx == n_s - 1

        @pl.when(jnp.logical_not(is_last))
        def _full_tile():
            sum_acc[...] += jnp.sum(x, axis=-1)
            max_acc[...] = jnp.maximum(max_acc[...], jnp.max(x, axis=-1))

        @pl.when(is_last)
        def _tail_tile():
            ids = lax.broadcasted_iota(jnp.int32, (1, 1, bs), 2) + s_idx * bs
            valid = ids < S
            sum_acc[...] += jnp.sum(jnp.where(valid, x, 0.0), axis=-1)
            max_acc[...] = jnp.maximum(
                max_acc[...],
                jnp.max(jnp.where(valid, x, -jnp.inf), axis=-1))
    else:
        sum_acc[...] += jnp.sum(x, axis=-1)
        max_acc[...] = jnp.maximum(max_acc[...], jnp.max(x, axis=-1))

    @pl.when(s_idx == n_s - 1)
    def _finalize():
        avg = sum_acc[...] * (1.0 / S)                       # (1, C)
        mx = max_acc[...]
        w1 = w1_ref[...].astype(jnp.float32)
        w2 = w2_ref[...].astype(jnp.float32)
        h_avg = jnp.maximum(
            jnp.dot(avg, w1, preferred_element_type=jnp.float32), 0.0)
        h_max = jnp.maximum(
            jnp.dot(mx, w1, preferred_element_type=jnp.float32), 0.0)
        logits = (jnp.dot(h_avg, w2, preferred_element_type=jnp.float32)
                  + jnp.dot(h_max, w2, preferred_element_type=jnp.float32))
        gate = 1.0 / (1.0 + jnp.exp(-logits))                # (1, C)
        o_ref[...] = gate[:, None, :].astype(o_ref.dtype)    # (1, 1, C)


def channel_attention_forward(x_nchw, w1, w2, *,
                              vmem_x_budget_bytes=40 * 1024 * 1024):
    """x: (N, C, H, W); w1: (C, C//r); w2: (C//r, C). Returns (N, C, 1, 1)."""
    N, C, H, W = x_nchw.shape
    Cr = w1.shape[1]
    S = H * W
    itemsize = jnp.dtype(x_nchw.dtype).itemsize

    # NCHW -> (N, C, S): contiguous trailing dims, pure reshape (no HBM pass).
    x = x_nchw.reshape(N, C, S)

    # Spatial (lane) tile: multiple of 128 (or the full dim when S <= 128),
    # sized so 2 pipeline buffers of one (1, C, bs) block fit the VMEM budget.
    if S <= 128:
        bs = S
    else:
        cap = vmem_x_budget_bytes // (2 * C * itemsize)      # 2 = double buffering
        bs = min(S, 2048, max(128, int(cap)))
        bs = (bs // 128) * 128
    n_s = pl.cdiv(S, bs)
    needs_mask = (S % bs) != 0

    kernel = functools.partial(
        _channel_attention_kernel, S=S, bs=bs, needs_mask=needs_mask)

    cost = pl.CostEstimate(
        flops=int(2 * N * C * S + 8 * N * C * Cr),
        transcendentals=int(N * C),
        bytes_accessed=int(N * C * S * itemsize
                           + 2 * C * Cr * jnp.dtype(w1.dtype).itemsize
                           + N * C * itemsize),
    )

    out = pl.pallas_call(
        kernel,
        out_shape=jax.ShapeDtypeStruct((N, 1, C), x_nchw.dtype),
        grid=(N, n_s),
        in_specs=[
            # NOTE: if a trace shows exposed DMA at grid-step boundaries, add
            # pipeline_mode=pl.Buffered(3) here (there is VMEM headroom).
            pl.BlockSpec((1, C, bs), lambda n, s: (n, 0, s)),
            pl.BlockSpec((C, Cr), lambda n, s: (0, 0)),
            pl.BlockSpec((Cr, C), lambda n, s: (0, 0)),
        ],
        out_specs=pl.BlockSpec((1, 1, C), lambda n, s: (n, 0, 0)),
        scratch_shapes=[
            pltpu.VMEM((1, C), jnp.float32),   # running sum  (per sample)
            pltpu.VMEM((1, C), jnp.float32),   # running max  (per sample)
        ],
        compiler_params=pltpu.CompilerParams(
            dimension_semantics=("parallel", "arbitrary"),
            vmem_limit_bytes=48 * 1024 * 1024,   # safe on v7x (64 MiB/TC), v5e/v6e (128 MiB)
        ),
        cost_estimate=cost,
    )(x, w1, w2)

    # (N, 1, C) and (N, C, 1, 1) share the same memory order -> free reshape.
    return out.reshape(N, C, 1, 1)


# ----------------------------------------------------------------------------
# Pure-JAX reference (for verification)
# ----------------------------------------------------------------------------
def reference_forward(x_nchw, w1, w2):
    avg = jnp.mean(x_nchw, axis=(2, 3))                      # (N, C)
    mx = jnp.max(x_nchw, axis=(2, 3))                        # (N, C)

    def fc(v):
        h = jnp.maximum(v @ w1, 0.0)
        return h @ w2

    out = jax.nn.sigmoid(fc(avg) + fc(mx))
    return out[:, :, None, None]


def _run_case(key, N, C, H, W, ratio):
    Cr = max(1, C // ratio)
    kx, k1, k2 = jax.random.split(key, 3)
    x = jax.random.normal(kx, (N, C, H, W), dtype=jnp.float32)
    w1 = 0.3 * jax.random.normal(k1, (C, Cr), dtype=jnp.float32)
    w2 = 0.3 * jax.random.normal(k2, (Cr, C), dtype=jnp.float32)

    out = jax.jit(channel_attention_forward)(x, w1, w2)
    out = jax.block_until_ready(out)
    assert out.shape == (N, C, 1, 1)

    ref = reference_forward(x, w1, w2)
    err = float(jnp.max(jnp.abs(out - ref)))
    assert err < 1e-5, f"mismatch vs reference (N={N},C={C},H={H},W={W}): {err}"


# ----------------------------------------------------------------------------
if __name__ == "__main__":
    key = jax.random.PRNGKey(0)
    k0, k1 = jax.random.split(key, 2)

    # Case 1: S divisible by 128 (no tail mask path).
    _run_case(k0, N=2, C=8, H=16, W=16, ratio=4)
    # Case 2: ragged spatial extent (exercises the last-tile mask path).
    _run_case(k1, N=2, C=16, H=9, W=15, ratio=4)

    print("KERNEL_OK")
</pallas_src>

<mosaic_0001>
module attributes {stable_mosaic.version = 11 : i64} {
  func.func @_channel_attention_kernel(%arg0: i32, %arg1: i32, %arg2: memref<1x8x256xf32, #tpu.memory_space<vmem>>, %arg3: memref<8x2xf32, #tpu.memory_space<vmem>>, %arg4: memref<2x8xf32, #tpu.memory_space<vmem>>, %arg5: memref<1x1x8xf32, #tpu.memory_space<vmem>>, %arg6: memref<1x8xf32, #tpu.memory_space<vmem>>, %arg7: memref<1x8xf32, #tpu.memory_space<vmem>>) attributes {dimension_semantics = [#tpu.dimension_semantics<parallel>, #tpu.dimension_semantics<arbitrary>], iteration_bounds = array<i64: 2, 1>, scalar_prefetch = 0 : i64, scratch_operands = 2 : i64, tpu.core_type = #tpu.core_type<tc>, window_params = [{transform_indices = @transform_0, window_bounds = array<i64: 1, 8, 256>}, {pipeline_mode = #tpu.pipeline_mode<synchronous>, transform_indices = @transform_1, window_bounds = array<i64: 8, 2>}, {pipeline_mode = #tpu.pipeline_mode<synchronous>, transform_indices = @transform_2, window_bounds = array<i64: 2, 8>}, {transform_indices = @transform_3, window_bounds = array<i64: 1, 1, 8>}]} {
    %c0_i32 = arith.constant 0 : i32
    %0 = arith.cmpi eq, %arg1, %c0_i32 : i32
    %1 = arith.extui %0 : i1 to i32
    %c0_i32_0 = arith.constant 0 : i32
    %2 = arith.cmpi ne, %1, %c0_i32_0 : i32
    scf.if %2 {
      %cst_14 = arith.constant 0.000000e+00 : f32
      %15 = vector.broadcast %cst_14 : f32 to vector<1x8xf32>
      %c0_15 = arith.constant 0 : index
      %c0_16 = arith.constant 0 : index
      %16 = vector.load %arg6[%c0_15, %c0_16] : memref<1x8xf32, #tpu.memory_space<vmem>>, vector<1x8xf32>
      tpu.vector_store %arg6[%c0_15, %c0_16], %15 {strides = array<i32>} : memref<1x8xf32, #tpu.memory_space<vmem>>, vector<1x8xf32>,
      %cst_17 = arith.constant 0xFF800000 : f32
      %17 = vector.broadcast %cst_17 : f32 to vector<1x8xf32>
      %c0_18 = arith.constant 0 : index
      %c0_19 = arith.constant 0 : index
      %18 = vector.load %arg7[%c0_18, %c0_19] : memref<1x8xf32, #tpu.memory_space<vmem>>, vector<1x8xf32>
      tpu.vector_store %arg7[%c0_18, %c0_19], %17 {strides = array<i32>} : memref<1x8xf32, #tpu.memory_space<vmem>>, vector<1x8xf32>,
    } else {
    }
    %c0 = arith.constant 0 : index
    %c0_1 = arith.constant 0 : index
    %c0_2 = arith.constant 0 : index
    %3 = vector.load %arg2[%c0, %c0_1, %c0_2] : memref<1x8x256xf32, #tpu.memory_space<vmem>>, vector<1x8x256xf32>
    %c0_3 = arith.constant 0 : index
    %c0_4 = arith.constant 0 : index
    %4 = vector.load %arg6[%c0_3, %c0_4] : memref<1x8xf32, #tpu.memory_space<vmem>>, vector<1x8xf32>
    %cst = arith.constant dense<0.000000e+00> : vector<1x8xf32>
    %5 = vector.multi_reduction <add>, %3, %cst [2] : vector<1x8x256xf32> to vector<1x8xf32>
    %6 = arith.addf %4, %5 : vector<1x8xf32>
    %c0_5 = arith.constant 0 : index
    %c0_6 = arith.constant 0 : index
    %7 = vector.load %arg6[%c0_5, %c0_6] : memref<1x8xf32, #tpu.memory_space<vmem>>, vector<1x8xf32>
    tpu.vector_store %arg6[%c0_5, %c0_6], %6 {strides = array<i32>} : memref<1x8xf32, #tpu.memory_space<vmem>>, vector<1x8xf32>,
    %c0_7 = arith.constant 0 : index
    %c0_8 = arith.constant 0 : index
    %8 = vector.load %arg7[%c0_7, %c0_8] : memref<1x8xf32, #tpu.memory_space<vmem>>, vector<1x8xf32>
    %cst_9 = arith.constant dense<0xFF800000> : vector<1x8xf32>
    %9 = vector.multi_reduction <maximumf>, %3, %cst_9 [2] : vector<1x8x256xf32> to vector<1x8xf32>
    %10 = arith.maximumf %8, %9 : vector<1x8xf32>
    %c0_10 = arith.constant 0 : index
    %c0_11 = arith.constant 0 : index
    %11 = vector.load %arg7[%c0_10, %c0_11] : memref<1x8xf32, #tpu.memory_space<vmem>>, vector<1x8xf32>
    tpu.vector_store %arg7[%c0_10, %c0_11], %10 {strides = array<i32>} : memref<1x8xf32, #tpu.memory_space<vmem>>, vector<1x8xf32>,
    %c0_i32_12 = arith.constant 0 : i32
    %12 = arith.cmpi eq, %arg1, %c0_i32_12 : i32
    %13 = arith.extui %12 : i1 to i32
    %c0_i32_13 = arith.constant 0 : i32
    %14 = arith.cmpi ne, %13, %c0_i32_13 : i32
    scf.if %14 {
      %c0_14 = arith.constant 0 : index
      %c0_15 = arith.constant 0 : index
      %15 = vector.load %arg6[%c0_14, %c0_15] : memref<1x8xf32, #tpu.memory_space<vmem>>, vector<1x8xf32>
      %cst_16 = arith.constant 3.906250e-03 : f32
      %16 = vector.broadcast %cst_16 : f32 to vector<1x8xf32>
      %17 = arith.mulf %15, %16 : vector<1x8xf32>
      %c0_17 = arith.constant 0 : index
      %c0_18 = arith.constant 0 : index
      %18 = vector.load %arg7[%c0_17, %c0_18] : memref<1x8xf32, #tpu.memory_space<vmem>>, vector<1x8xf32>
      %c0_19 = arith.constant 0 : index
      %c0_20 = arith.constant 0 : index
      %19 = vector.load %arg3[%c0_19, %c0_20] : memref<8x2xf32, #tpu.memory_space<vmem>>, vector<8x2xf32>
      %c0_21 = arith.constant 0 : index
      %c0_22 = arith.constant 0 : index
      %20 = vector.load %arg4[%c0_21, %c0_22] : memref<2x8xf32, #tpu.memory_space<vmem>>, vector<2x8xf32>
      %cst_23 = arith.constant dense<0.000000e+00> : vector<1x2xf32>
      %21 = tpu.matmul %17, %19, %cst_23 {dimension_numbers = #tpu.dot_dimension_numbers<[1], [0], [0], [1], [0, 0, 1, 1], [], []>} : vector<1x8xf32>, vector<8x2xf32>, vector<1x2xf32> -> vector<1x2xf32>
      %cst_24 = arith.constant 0.000000e+00 : f32
      %22 = vector.broadcast %cst_24 : f32 to vector<1x2xf32>
      %23 = arith.maximumf %21, %22 : vector<1x2xf32>
      %cst_25 = arith.constant dense<0.000000e+00> : vector<1x2xf32>
      %24 = tpu.matmul %18, %19, %cst_25 {dimension_numbers = #tpu.dot_dimension_numbers<[1], [0], [0], [1], [0, 0, 1, 1], [], []>} : vector<1x8xf32>, vector<8x2xf32>, vector<1x2xf32> -> vector<1x2xf32>
      %cst_26 = arith.constant 0.000000e+00 : f32
      %25 = vector.broadcast %cst_26 : f32 to vector<1x2xf32>
      %26 = arith.maximumf %24, %25 : vector<1x2xf32>
      %cst_27 = arith.constant dense<0.000000e+00> : vector<1x8xf32>
      %27 = tpu.matmul %23, %20, %cst_27 {dimension_numbers = #tpu.dot_dimension_numbers<[1], [0], [0], [1], [0, 0, 1, 1], [], []>} : vector<1x2xf32>, vector<2x8xf32>, vector<1x8xf32> -> vector<1x8xf32>
      %cst_28 = arith.constant dense<0.000000e+00> : vector<1x8xf32>
      %28 = tpu.matmul %26, %20, %cst_28 {dimension_numbers = #tpu.dot_dimension_numbers<[1], [0], [0], [1], [0, 0, 1, 1], [], []>} : vector<1x2xf32>, vector<2x8xf32>, vector<1x8xf32> -> vector<1x8xf32>
      %29 = arith.addf %27, %28 : vector<1x8xf32>
      %cst_29 = arith.constant 0.000000e+00 : f32
      %30 = vector.broadcast %cst_29 : f32 to vector<1x8xf32>
      %31 = arith.subf %30, %29 : vector<1x8xf32>
      %32 = math.exp %31 : vector<1x8xf32>
      %cst_30 = arith.constant 1.000000e+00 : f32
      %33 = vector.broadcast %cst_30 : f32 to vector<1x8xf32>
      %34 = arith.addf %33, %32 : vector<1x8xf32>
      %cst_31 = arith.constant 1.000000e+00 : f32
      %35 = vector.broadcast %cst_31 : f32 to vector<1x8xf32>
      %36 = arith.divf %35, %34 : vector<1x8xf32>
      %37 = vector.shape_cast %36 : vector<1x8xf32> to vector<1x1x8xf32>
      %c0_32 = arith.constant 0 : index
      %c0_33 = arith.constant 0 : index
      %c0_34 = arith.constant 0 : index
      %38 = vector.load %arg5[%c0_32, %c0_33, %c0_34] : memref<1x1x8xf32, #tpu.memory_space<vmem>>, vector<1x1x8xf32>
      tpu.vector_store %arg5[%c0_32, %c0_33, %c0_34], %37 {strides = array<i32>} : memref<1x1x8xf32, #tpu.memory_space<vmem>>, vector<1x1x8xf32>,
    } else {
    }
    return
  }
  func.func @transform_0(%arg0: i32, %arg1: i32) -> (i32, i32, i32) {
    %c0_i32 = arith.constant 0 : i32
    %c0_i32_0 = arith.constant 0 : i32
    return %arg0, %c0_i32, %arg1 : i32, i32, i32
  }
  func.func @transform_1(%arg0: i32, %arg1: i32) -> (i32, i32) {
    %c0_i32 = arith.constant 0 : i32
    %c0_i32_0 = arith.constant 0 : i32
    %c0_i32_1 = arith.constant 0 : i32
    return %c0_i32, %c0_i32_0 : i32, i32
  }
  func.func @transform_2(%arg0: i32, %arg1: i32) -> (i32, i32) {
    %c0_i32 = arith.constant 0 : i32
    %c0_i32_0 = arith.constant 0 : i32
    %c0_i32_1 = arith.constant 0 : i32
    return %c0_i32, %c0_i32_0 : i32, i32
  }
  func.func @transform_3(%arg0: i32, %arg1: i32) -> (i32, i32, i32) {
    %c0_i32 = arith.constant 0 : i32
    %c0_i32_0 = arith.constant 0 : i32
    %c0_i32_1 = arith.constant 0 : i32
    return %arg0, %c0_i32, %c0_i32_0 : i32, i32, i32
  }
}

</mosaic_0001>

<llo_original>
// kernel: channel_attention_forward.1
$region0: #{channel_attention_forward.1}
  #allocation0 [shape = 'u32[]', space=smem, size = 0x4, offset = 0x4, fixed_abs, tag = 'smem constant byte address 0x4 - core index']
  #allocation1 [shape = 'u32[144,128]{1,0:T(1,128)}', space=vmem, size = 0x12000, scoped, tag = 'internal scratch']
  #allocation2 [shape = 'f32[1,8]{1,0:T(1,128)}', space=vmem, size = 0x200, scoped, tag = 'scratch operand']
  #allocation3 [shape = 'f32[1,8]{1,0:T(1,128)}', space=vmem, size = 0x200, scoped, tag = 'scratch operand']
  %s0 = inlined_call_operand.vmem [shape: f32[2,8,256], index: 0, kind: input, shape index: {}]
  %s1 = inlined_call_operand.vmem [shape: f32[8,2], index: 1, kind: input, shape index: {}]
  %s2 = inlined_call_operand.vmem [shape: f32[2,8], index: 2, kind: input, shape index: {}]
  %s3 = inlined_call_operand.hbm [shape: f32[2,1,8], index: 3, kind: output, shape index: {}]
  %s4 = sld [smem:[#allocation0]]
  $region53: #{channel_attention_forward.1} parent=0
    _
  %s6 = ssub.s32 1, %s4
  %s7 = scalar_select 0, %s6, %s4
  $region1: #{channel_attention_forward.1} parent=0
    #allocation4 [shape = 'u8[1024]{0}', space=vmem, size = 0x400, scoped, tag = 'output window, operand 0']
    #allocation5 [shape = 's32[2]{0}', space=sflag, size = 0x8, scoped, tag = 'scoped memory for channel_attention_forward.1']
    %8 = vsyncpa [#allocation5], 0
    %s9 = scalar_lea.sflag [#allocation5], 1
    %10 = vsyncpa %s9, 0
    loop: start=0, step=1, limit=4
    $region2: #{channel_attention_forward.1} parent=1 // loop_pre_header
      _
    $region3: #{channel_attention_forward.1} parent=1 // loop_header
      %s12 = sphi 0, %s16
      %p13 = scmp.ge.s32.totalorder %s12, 4
      %s19 = sphi 0, %s31
      %s20 = sphi 0, %s27
      %s21 = sphi 0, %s19
      %s22 = sphi 0, %s20
      %s23 = sphi 0, %s21
      %s24 = sphi 0, %s22
      %s36 = sphi 0, %s38
      %s39 = sphi 0, %s36
      %s40 = sphi 0, %s39
      %s56 = sphi 0, %s40
      %s60 = sphi 0, %s60
      %s62 = sphi 0, %s60
      %s63 = sphi 0, %s62
      %s77 = sphi 0, %s63
      %s81 = sphi 0, %s81
      %s83 = sphi 0, %s81
      %s84 = sphi 0, %s83
      %s98 = sphi 0, %s84
      %s104 = sphi 0, %s106
      %s107 = sphi 0, %s104
      %s108 = sphi 0, %s107
      %s124 = sphi 0, %s108
    $region4: #{channel_attention_forward.1} parent=1 // loop_header_branch
      %15 = sbr.rel (%p13) target = $region8
    $region5: #{channel_attention_forward.1} parent=1 // loop_body
      %s17 = ssub.s32 %s12, 1
      %s18 = ssub.s32 %s12, 2
      %s25 = sadd.s32 1, %s20
      %p26 = scmp.ge.s32.totalorder %s25, 1
      %s27 = scalar_select %p26, 0, %s25
      %s28 = sadd.s32 1, %s19
      %s29 = scalar_select %p26, %s28, %s19
      %p30 = scmp.ge.s32.totalorder %s29, 2
      %s31 = scalar_select %p30, 0, %s29
      %s32 = ssub.s32 %s19, %s31
      %s33 = ssub.s32 %s20, %s27
      %s34 = sor.u32 %s32, %s33
      %p35 = scmp.eq.s32.totalorder %s34, 0
      %s37 = sadd.s32 %s36, 1
      %s38 = scalar_select %p35, %s36, %s37
      %p41 = pneg %p35
      %p42 = scmp.eq.s32.totalorder %s12, 1
      %p43 = por %p41, %p42
      %p44 = scmp.ne.s32.totalorder %s36, %s39
      %p45 = scmp.eq.s32.totalorder %s12, 0
      %p46 = por %p44, %p45
      %p47 = scmp.ne.s32.totalorder %s36, %s39
      %p48 = scmp.eq.s32.totalorder %s17, 1
      %p49 = por %p47, %p48
      %p50 = scmp.ne.s32.totalorder %s39, %s40
      %p51 = scmp.eq.s32.totalorder %s17, 0
      %p52 = por %p50, %p51
      %p53 = scmp.ne.s32.totalorder %s39, %s40
      %p54 = scmp.eq.s32.totalorder %s18, 1
      %p55 = por %p53, %p54
      %p57 = scmp.ne.s32.totalorder %s40, %s56
      %p58 = scmp.eq.s32.totalorder %s18, 0
      %p59 = por %p57, %p58
      %s61 = sadd.s32 %s60, 1
      %p64 = scmp.eq.s32.totalorder %s12, 1
      %p65 = scmp.ne.s32.totalorder %s60, %s62
      %p66 = scmp.eq.s32.totalorder %s12, 0
      %p67 = por %p65, %p66
      %p68 = scmp.ne.s32.totalorder %s60, %s62
      %p69 = scmp.eq.s32.totalorder %s17, 1
      %p70 = por %p68, %p69
      %p71 = scmp.ne.s32.totalorder %s62, %s63
      %p72 = scmp.eq.s32.totalorder %s17, 0
      %p73 = por %p71, %p72
      %p74 = scmp.ne.s32.totalorder %s62, %s63
      %p75 = scmp.eq.s32.totalorder %s18, 1
      %p76 = por %p74, %p75
      %p78 = scmp.ne.s32.totalorder %s63, %s77
      %p79 = scmp.eq.s32.totalorder %s18, 0
      %p80 = por %p78, %p79
      %s82 = sadd.s32 %s81, 1
      %p85 = scmp.eq.s32.totalorder %s12, 1
      %p86 = scmp.ne.s32.totalorder %s81, %s83
      %p87 = scmp.eq.s32.totalorder %s12, 0
      %p88 = por %p86, %p87
      %p89 = scmp.ne.s32.totalorder %s81, %s83
      %p90 = scmp.eq.s32.totalorder %s17, 1
      %p91 = por %p89, %p90
      %p92 = scmp.ne.s32.totalorder %s83, %s84
      %p93 = scmp.eq.s32.totalorder %s17, 0
      %p94 = por %p92, %p93
      %p95 = scmp.ne.s32.totalorder %s83, %s84
      %p96 = scmp.eq.s32.totalorder %s18, 1
      %p97 = por %p95, %p96
      %p99 = scmp.ne.s32.totalorder %s84, %s98
      %p100 = scmp.eq.s32.totalorder %s18, 0
      %p101 = por %p99, %p100
      %s102 = ssub.s32 %s19, %s31
      %p103 = scmp.eq.s32.totalorder %s102, 0
      %s105 = sadd.s32 %s104, 1
      %s106 = scalar_select %p103, %s104, %s105
      %p109 = pneg %p103
      %p110 = scmp.eq.s32.totalorder %s12, 1
      %p111 = por %p109, %p110
      %p112 = scmp.ne.s32.totalorder %s104, %s107
      %p113 = scmp.eq.s32.totalorder %s12, 0
      %p114 = por %p112, %p113
      %p115 = scmp.ne.s32.totalorder %s104, %s107
      %p116 = scmp.eq.s32.totalorder %s17, 1
      %p117 = por %p115, %p116
      %p118 = scmp.ne.s32.totalorder %s107, %s108
      %p119 = scmp.eq.s32.totalorder %s17, 0
      %p120 = por %p118, %p119
      %p121 = scmp.ne.s32.totalorder %s107, %s108
      %p122 = scmp.eq.s32.totalorder %s18, 1
      %p123 = por %p121, %p122
      %p125 = scmp.ne.s32.totalorder %s108, %s124
      %p126 = scmp.eq.s32.totalorder %s18, 0
      %p127 = por %p125, %p126
      %p128 = scmp.le.s32.totalorder 1, %s12
      %p129 = scmp.lt.s32.totalorder %s12, 3
      %p130 = pnand %p128, %p129
      %p131 = pneg %p130
      // Predicated region
      $region9: #{channel_attention_forward.1} parent=5 // pred_check
        _
      $region10: #{channel_attention_forward.1} parent=5 // pred_check_branch
        %133 = sbr.rel (%p130) target = $region12
      $region11: #{channel_attention_forward.1} parent=5 // pred_region
        %s134 = ssub.s32 %s12, 1
        // Predicated region
        $region13: #{channel_attention_forward.1} parent=11 // pred_check
          %p135 = pneg %p73
        $region14: #{channel_attention_forward.1} parent=11 // pred_check_branch
          %137 = sbr.rel (%p135) target = $region16
        $region15: #{channel_attention_forward.1} parent=11 // pred_region
          _
        $region16: #{channel_attention_forward.1} parent=11 // pred_fallthru
          _
        // Predicated region
        $region17: #{channel_attention_forward.1} parent=11 // pred_check
          %p138 = pneg %p94
        $region18: #{channel_attention_forward.1} parent=11 // pred_check_branch
          %140 = sbr.rel (%p138) target = $region20
        $region19: #{channel_attention_forward.1} parent=11 // pred_region
          _
        $region20: #{channel_attention_forward.1} parent=11 // pred_fallthru
          _
      $region12: #{channel_attention_forward.1} parent=5 // pred_fallthru
        _
      %p141 = scmp.lt.s32.totalorder %s12, 2
      // Predicated region
      $region21: #{channel_attention_forward.1} parent=5 // pred_check
        %p142 = pneg %p141
      $region22: #{channel_attention_forward.1} parent=5 // pred_check_branch
        %144 = sbr.rel (%p142) target = $region24
      $region23: #{channel_attention_forward.1} parent=5 // pred_region
        // Predicated region
        $region25: #{channel_attention_forward.1} parent=23 // pred_check
          %p145 = pneg %p46
        $region26: #{channel_attention_forward.1} parent=23 // pred_check_branch
          %147 = sbr.rel (%p145) target = $region28
        $region27: #{channel_attention_forward.1} parent=23 // pred_region
          %s148 = smul.u32 2, %s20
          %p149 = scmp.lt.s32.totalorder %s19, 1
          %s150 = scalar_select %p149, %s19, 1
          %p151 = scmp.lt.s32.totalorder %s148, 1
          %s152 = scalar_select %p151, %s148, 1
          %s153 = smul.addr %s150, 2
          %s154 = sadd.s32 %s152, %s153
          %s155 = smul.addr %s154, 8
          %s156 = scalar_lea.vmem %s0, %s155
          %s157 = smul.u32 2, %s20
        $region28: #{channel_attention_forward.1} parent=23 // pred_fallthru
          _
      $region24: #{channel_attention_forward.1} parent=5 // pred_fallthru
        _
      %p158 = scmp.le.s32.totalorder 1, %s12
      %p159 = scmp.lt.s32.totalorder %s12, 3
      %p160 = pnand %p158, %p159
      %p161 = pneg %p160
      // Predicated region
      $region29: #{channel_attention_forward.1} parent=5 // pred_check
        _
      $region30: #{channel_attention_forward.1} parent=5 // pred_check_branch
        %163 = sbr.rel (%p160) target = $region32
      $region31: #{channel_attention_forward.1} parent=5 // pred_region
        %s164 = ssub.s32 %s12, 1
        %s165 = smul.u32 2, %s22
        %p166 = scmp.lt.s32.totalorder %s21, 1
        %s167 = scalar_select %p166, %s21, 1
        %p168 = scmp.lt.s32.totalorder %s165, 1
        %s169 = scalar_select %p168, %s165, 1
        %s170 = smul.addr %s167, 2
        %s171 = sadd.s32 %s169, %s170
        %s172 = smul.addr %s171, 8
        %s173 = scalar_lea.vmem %s0, %s172
        %p174 = pneg %p52
        %p175 = pneg %p49
        %p176 = pneg %p73
        %p177 = pneg %p70
        %p178 = pneg %p94
        %p179 = pneg %p91
        %p180 = pneg %p120
        %p181 = pneg %p117
        %s182 = sand.u32 %s107, 1
        %s183 = scalar_lea.sflag [#allocation5], %s182
        %s184 = sand.u32 %s107, 1
        %s185 = scalar_lea.vmem [#allocation4], %s184
        %s186 = smul.u32 2, %s22
        %p187 = scmp.lt.s32.totalorder %s21, 1
        %s188 = scalar_select %p187, %s21, 1
        %p189 = scmp.lt.s32.totalorder %s186, 1
        %s190 = scalar_select %p189, %s186, 1
        %s191 = smul.addr %s188, 2
        %s192 = sadd.s32 %s190, %s191
        %s193 = smul.addr %s192, 8
        %s194 = scalar_lea.vmem %s0, %s193
        %s195 = smul.u32 2, %s22
        %p196 = scmp.eq.s32.totalorder %s22, 0
        // Predicated region
        $region33: #{channel_attention_forward.1} parent=31 // pred_check
          %p197 = pneg %p196
        $region34: #{channel_attention_forward.1} parent=31 // pred_check_branch
          %199 = sbr.rel (%p197) target = $region36
        $region35: #{channel_attention_forward.1} parent=31 // pred_region
          %vm200 = vcmask 57344
          %201 = vst.msk [vmem:[#allocation2] sm:$0x1] %vm200, 0.0
          %202 = vst.msk [vmem:[#allocation3] sm:$0x1] %vm200, -inf
        $region36: #{channel_attention_forward.1} parent=31 // pred_fallthru
          _
        %v203 = vld [vmem:[%s194] sm:$0xff]
        %v204 = vld [vmem:[%s194 + $0x8] sm:$0xff]
        %v205 = vld [vmem:[#allocation2] sm:$0x1]
        %v206 = vadd.f32 %v203, %v204
        %207 = vadd.xlane.f32.xlu0 %v206
        %v208 = vpop.xlane.xlu0 %207
        %v210 = vlaneseq
        %v211 = vshrl.u32 %v210, 7
        %v212 = vsub.s32 0, %v211
        %v213 = vrot.slane %v208, %v212
        %v214 = vlaneseq
        %v215 = vshrl.u32 %v214, 7
        %v216 = vsub.s32 1, %v215
        %v217 = vrot.slane %v208, %v216
        %v218 = vlaneseq
        %v219 = vshrl.u32 %v218, 7
        %v220 = vsub.s32 2, %v219
        %v221 = vrot.slane %v208, %v220
        %v222 = vlaneseq
        %v223 = vshrl.u32 %v222, 7
        %v224 = vsub.s32 3, %v223
        %v225 = vrot.slane %v208, %v224
        %v226 = vlaneseq
        %v227 = vshrl.u32 %v226, 7
        %v228 = vsub.s32 4, %v227
        %v229 = vrot.slane %v208, %v228
        %v230 = vlaneseq
        %v231 = vshrl.u32 %v230, 7
        %v232 = vsub.s32 5, %v231
        %v233 = vrot.slane %v208, %v232
        %v234 = vlaneseq
        %v235 = vshrl.u32 %v234, 7
        %v236 = vsub.s32 6, %v235
        %v237 = vrot.slane %v208, %v236
        %v238 = vlaneseq
        %v239 = vshrl.u32 %v238, 7
        %v240 = vsub.s32 7, %v239
        %v241 = vrot.slane %v208, %v240
        %v242 = vcombine.low %v213, %v217
        %v243 = vcombine.low %v221, %v225
        %v244 = vcombine.low %v229, %v233
        %v245 = vcombine.low %v237, %v241
        %v247 = vunpack.c.l.s4 1966171168
        %v248 = vunpack.c.0.s8 %v247
        %v249 = vlaneseq
        %v250 = vshrl.u32 %v249, 7
        %v251 = vsub.s32 %v248, %v250
        %v252 = vrot.slane %v242, %v251
        %v254 = vunpack.c.l.s4 1966171168
        %v255 = vunpack.c.0.s8 %v254
        %v256 = vlaneseq
        %v257 = vshrl.u32 %v256, 7
        %v258 = vsub.s32 %v255, %v257
        %v259 = vrot.slane %v243, %v258
        %v261 = vunpack.c.l.s4 1966171168
        %v262 = vunpack.c.0.s8 %v261
        %v263 = vlaneseq
        %v264 = vshrl.u32 %v263, 7
        %v265 = vsub.s32 %v262, %v264
        %v266 = vrot.slane %v244, %v265
        %v268 = vunpack.c.l.s4 1966171168
        %v269 = vunpack.c.0.s8 %v268
        %v270 = vlaneseq
        %v271 = vshrl.u32 %v270, 7
        %v272 = vsub.s32 %v269, %v271
        %v273 = vrot.slane %v245, %v272
        %v274 = vcombine.low %v252, %v259
        %v275 = vcombine.low %v266, %v273
        %v277 = vunpack.c.l.s4 1966171168
        %v278 = vunpack.c.0.s8 %v277
        %v279 = vlaneseq
        %v280 = vshrl.u32 %v279, 7
        %v281 = vsub.s32 %v278, %v280
        %v282 = vrot.slane %v274, %v281
        %v284 = vunpack.c.l.s4 1966171168
        %v285 = vunpack.c.0.s8 %v284
        %v286 = vlaneseq
        %v287 = vshrl.u32 %v286, 7
        %v288 = vsub.s32 %v285, %v287
        %v289 = vrot.slane %v275, %v288
        %v290 = vcombine.low %v282, %v289
        %291 = vset.pattern.permute.xlu0 0
        %292 = vperm.xlu0 %291, %v290
        %v293 = vpop.permute.xlu0 %292
        %v294 = vlaneseq
        %v295 = vand.u32 %v294, 127
        %v296 = vlaneseq
        %v297 = vshrl.u32 %v296, 7
        %v298 = vsub.s32 %v295, %v297
        %v299 = vrot.slane %v293, %v298
        %v301 = vunpack.c.l.s4 1966171168
        %v302 = vunpack.c.0.s8 %v301
        %v303 = vlaneseq
        %v304 = vshrl.u32 %v303, 7
        %v305 = vsub.s32 %v302, %v304
        %v306 = vrot.slane %v299, %v305
        %v308 = vunpack.c.l.s4 1966171168
        %v309 = vunpack.c.0.s8 %v308
        %v310 = vlaneseq
        %v311 = vshrl.u32 %v310, 7
        %v312 = vsub.s32 %v309, %v311
        %v313 = vrot.slane %v306, %v312
        %v315 = vadd.f32 %v205, %v313
        %vm316 = vcmask 57344
        %317 = vst.msk [vmem:[#allocation2] sm:$0x1] %vm316, %v315
        %v318 = vld [vmem:[#allocation3] sm:$0x1]
        %v319 = vmax.f32 %v203, %v204
        %320 = vmax.xlane.f32.xlu0 %v319
        %v321 = vpop.xlane.xlu0 %320
        %v323 = vlaneseq
        %v324 = vshrl.u32 %v323, 7
        %v325 = vsub.s32 0, %v324
        %v326 = vrot.slane %v321, %v325
        %v327 = vlaneseq
        %v328 = vshrl.u32 %v327, 7
        %v329 = vsub.s32 1, %v328
        %v330 = vrot.slane %v321, %v329
        %v331 = vlaneseq
        %v332 = vshrl.u32 %v331, 7
        %v333 = vsub.s32 2, %v332
        %v334 = vrot.slane %v321, %v333
        %v335 = vlaneseq
        %v336 = vshrl.u32 %v335, 7
        %v337 = vsub.s32 3, %v336
        %v338 = vrot.slane %v321, %v337
        %v339 = vlaneseq
        %v340 = vshrl.u32 %v339, 7
        %v341 = vsub.s32 4, %v340
        %v342 = vrot.slane %v321, %v341
        %v343 = vlaneseq
        %v344 = vshrl.u32 %v343, 7
        %v345 = vsub.s32 5, %v344
        %v346 = vrot.slane %v321, %v345
        %v347 = vlaneseq
        %v348 = vshrl.u32 %v347, 7
        %v349 = vsub.s32 6, %v348
        %v350 = vrot.slane %v321, %v349
        %v351 = vlaneseq
        %v352 = vshrl.u32 %v351, 7
        %v353 = vsub.s32 7, %v352
        %v354 = vrot.slane %v321, %v353
        %v355 = vcombine.low %v326, %v330
        %v356 = vcombine.low %v334, %v338
        %v357 = vcombine.low %v342, %v346
        %v358 = vcombine.low %v350, %v354
        %v360 = vunpack.c.l.s4 1966171168
        %v361 = vunpack.c.0.s8 %v360
        %v362 = vlaneseq
        %v363 = vshrl.u32 %v362, 7
        %v364 = vsub.s32 %v361, %v363
        %v365 = vrot.slane %v355, %v364
        %v367 = vunpack.c.l.s4 1966171168
        %v368 = vunpack.c.0.s8 %v367
        %v369 = vlaneseq
        %v370 = vshrl.u32 %v369, 7
        %v371 = vsub.s32 %v368, %v370
        %v372 = vrot.slane %v356, %v371
        %v374 = vunpack.c.l.s4 1966171168
        %v375 = vunpack.c.0.s8 %v374
        %v376 = vlaneseq
        %v377 = vshrl.u32 %v376, 7
        %v378 = vsub.s32 %v375, %v377
        %v379 = vrot.slane %v357, %v378
        %v381 = vunpack.c.l.s4 1966171168
        %v382 = vunpack.c.0.s8 %v381
        %v383 = vlaneseq
        %v384 = vshrl.u32 %v383, 7
        %v385 = vsub.s32 %v382, %v384
        %v386 = vrot.slane %v358, %v385
        %v387 = vcombine.low %v365, %v372
        %v388 = vcombine.low %v379, %v386
        %v390 = vunpack.c.l.s4 1966171168
        %v391 = vunpack.c.0.s8 %v390
        %v392 = vlaneseq
        %v393 = vshrl.u32 %v392, 7
        %v394 = vsub.s32 %v391, %v393
        %v395 = vrot.slane %v387, %v394
        %v397 = vunpack.c.l.s4 1966171168
        %v398 = vunpack.c.0.s8 %v397
        %v399 = vlaneseq
        %v400 = vshrl.u32 %v399, 7
        %v401 = vsub.s32 %v398, %v400
        %v402 = vrot.slane %v388, %v401
        %v403 = vcombine.low %v395, %v402
        %404 = vset.pattern.permute.xlu0 0
        %405 = vperm.xlu0 %404, %v403
        %v406 = vpop.permute.xlu0 %405
        %v407 = vlaneseq
        %v408 = vshrl.u32 %v407, 7
        %v409 = vsub.s32 %v295, %v408
        %v410 = vrot.slane %v406, %v409
        %v412 = vunpack.c.l.s4 1966171168
        %v413 = vunpack.c.0.s8 %v412
        %v414 = vlaneseq
        %v415 = vshrl.u32 %v414, 7
        %v416 = vsub.s32 %v413, %v415
        %v417 = vrot.slane %v410, %v416
        %v419 = vunpack.c.l.s4 1966171168
        %v420 = vunpack.c.0.s8 %v419
        %v421 = vlaneseq
        %v422 = vshrl.u32 %v421, 7
        %v423 = vsub.s32 %v420, %v422
        %v424 = vrot.slane %v417, %v423
        %v426 = vmax.f32 %v318, %v424
        %427 = vst.msk [vmem:[#allocation3] sm:$0x1] %vm316, %v426
        // Predicated region
        $region37: #{channel_attention_forward.1} parent=31 // pred_check
          %p428 = pneg %p196
        $region38: #{channel_attention_forward.1} parent=31 // pred_check_branch
          %430 = sbr.rel (%p428) target = $region40
        $region39: #{channel_attention_forward.1} parent=31 // pred_region
          %v431 = vld [vmem:[#allocation2] sm:$0x1]
          %v432 = vmul.f32 %v431, 0.00390625
          %v433 = vld [vmem:[#allocation3] sm:$0x1]
          %v434 = vld [vmem:[%s1] sm:$0xff]
          %v435 = vld [vmem:[%s2] sm:$0x3]
          %vm436 = vcmask 64512
          %v438 = vsel %vm436, %v432, 0
          %440 = vmatprep.subr.mxu0 0.0
          %441 = vmatpush1.msra.mxu0 %v434
          %442 = vmatprep.subr.mxu0 0.0
          %443 = vmatpush1.msra.mxu0 0.0
          %444 = vmatprep.subr.mxu0 0.0
          %445 = vmatpush1.msra.mxu0 0.0
          %446 = vmatprep.subr.mxu0 0.0
          %447 = vmatpush1.msra.mxu0 0.0
          %448 = vmatprep.subr.mxu0 0.0
          %449 = vmatpush1.msra.mxu0 0.0
          %450 = vmatprep.subr.mxu0 0.0
          %451 = vmatpush1.msra.mxu0 0.0
          %452 = vmatprep.subr.mxu0 0.0
          %453 = vmatpush1.msra.mxu0 0.0
          %454 = vmatprep.subr.mxu0 0.0
          %455 = vmatpush1.msra.mxu0 0.0
          %456 = vmatprep.subr.mxu0 0.0
          %457 = vmatpush1.msra.mxu0 0.0
          %458 = vmatprep.subr.mxu0 0.0
          %459 = vmatpush1.msra.mxu0 0.0
          %460 = vmatprep.subr.mxu0 0.0
          %461 = vmatpush1.msra.mxu0 0.0
          %462 = vmatprep.subr.mxu0 0.0
          %463 = vmatpush1.msra.mxu0 0.0
          %464 = vmatprep.subr.mxu0 0.0
          %465 = vmatpush1.msra.mxu0 0.0
          %466 = vmatprep.subr.mxu0 0.0
          %467 = vmatpush1.msra.mxu0 0.0
          %468 = vmatprep.subr.mxu0 0.0
          %469 = vmatpush1.msra.mxu0 0.0
          %470 = vmatprep.subr.mxu0 0.0
          %471 = vmatpush1.msra.mxu0 0.0
          %472 = vmatprep.subr.mxu0 0.0
          %473 = vmatpush1.msra.mxu0 0.0
          %474 = vmatprep.subr.mxu0 0.0
          %475 = vmatpush1.msra.mxu0 0.0
          %476 = vmatprep.subr.mxu0 0.0
          %477 = vmatpush1.msra.mxu0 0.0
          %478 = vmatprep.subr.mxu0 0.0
          %479 = vmatpush1.msra.mxu0 0.0
          %480 = vmatprep.subr.mxu0 0.0
          %481 = vmatpush1.msra.mxu0 0.0
          %482 = vmatprep.subr.mxu0 0.0
          %483 = vmatpush1.msra.mxu0 0.0
          %484 = vmatprep.subr.mxu0 0.0
          %485 = vmatpush1.msra.mxu0 0.0
          %486 = vmatprep.subr.mxu0 0.0
          %487 = vmatpush1.msra.mxu0 0.0
          %488 = vmatprep.subr.mxu0 0.0
          %489 = vmatpush1.msra.mxu0 0.0
          %490 = vmatprep.subr.mxu0 0.0
          %491 = vmatpush1.msra.mxu0 0.0
          %492 = vmatprep.subr.mxu0 0.0
          %493 = vmatpush1.msra.mxu0 0.0
          %494 = vmatprep.subr.mxu0 0.0
          %495 = vmatpush1.msra.mxu0 0.0
          %496 = vmatprep.subr.mxu0 0.0
          %497 = vmatpush1.msra.mxu0 0.0
          %498 = vmatprep.subr.mxu0 0.0
          %499 = vmatpush1.msra.mxu0 0.0
          %500 = vmatprep.subr.mxu0 0.0
          %501 = vmatpush1.msra.mxu0 0.0
          %502 = vmatprep.subr.mxu0 0.0
          %503 = vmatpush1.msra.mxu0 0.0
          %504 = vmatprep.mubr.f32.mxu0 0.0
          %505 = vmatmul.mubr.f32.gmra.mrb[0].mxu0 %v438
          %v506 = vpop.f32.mrb[0].mxu0
          %v507 = vadd.f32 0.0, %v506
          %v508 = vpop.f32.mrb[0].mxu0
          %509 = vdwg.mxu0
          %v510 = vmax.f32 %v507, 0.0
          %v512 = vsel %vm436, %v433, 0
          %514 = vmatprep.subr.mxu0 0.0
          %515 = vmatpush1.msra.mxu0 %v434
          %516 = vmatprep.subr.mxu0 0.0
          %517 = vmatpush1.msra.mxu0 0.0
          %518 = vmatprep.subr.mxu0 0.0
          %519 = vmatpush1.msra.mxu0 0.0
          %520 = vmatprep.subr.mxu0 0.0
          %521 = vmatpush1.msra.mxu0 0.0
          %522 = vmatprep.subr.mxu0 0.0
          %523 = vmatpush1.msra.mxu0 0.0
          %524 = vmatprep.subr.mxu0 0.0
          %525 = vmatpush1.msra.mxu0 0.0
          %526 = vmatprep.subr.mxu0 0.0
          %527 = vmatpush1.msra.mxu0 0.0
          %528 = vmatprep.subr.mxu0 0.0
          %529 = vmatpush1.msra.mxu0 0.0
          %530 = vmatprep.subr.mxu0 0.0
          %531 = vmatpush1.msra.mxu0 0.0
          %532 = vmatprep.subr.mxu0 0.0
          %533 = vmatpush1.msra.mxu0 0.0
          %534 = vmatprep.subr.mxu0 0.0
          %535 = vmatpush1.msra.mxu0 0.0
          %536 = vmatprep.subr.mxu0 0.0
          %537 = vmatpush1.msra.mxu0 0.0
          %538 = vmatprep.subr.mxu0 0.0
          %539 = vmatpush1.msra.mxu0 0.0
          %540 = vmatprep.subr.mxu0 0.0
          %541 = vmatpush1.msra.mxu0 0.0
          %542 = vmatprep.subr.mxu0 0.0
          %543 = vmatpush1.msra.mxu0 0.0
          %544 = vmatprep.subr.mxu0 0.0
          %545 = vmatpush1.msra.mxu0 0.0
          %546 = vmatprep.subr.mxu0 0.0
          %547 = vmatpush1.msra.mxu0 0.0
          %548 = vmatprep.subr.mxu0 0.0
          %549 = vmatpush1.msra.mxu0 0.0
          %550 = vmatprep.subr.mxu0 0.0
          %551 = vmatpush1.msra.mxu0 0.0
          %552 = vmatprep.subr.mxu0 0.0
          %553 = vmatpush1.msra.mxu0 0.0
          %554 = vmatprep.subr.mxu0 0.0
          %555 = vmatpush1.msra.mxu0 0.0
          %556 = vmatprep.subr.mxu0 0.0
          %557 = vmatpush1.msra.mxu0 0.0
          %558 = vmatprep.subr.mxu0 0.0
          %559 = vmatpush1.msra.mxu0 0.0
          %560 = vmatprep.subr.mxu0 0.0
          %561 = vmatpush1.msra.mxu0 0.0
          %562 = vmatprep.subr.mxu0 0.0
          %563 = vmatpush1.msra.mxu0 0.0
          %564 = vmatprep.subr.mxu0 0.0
          %565 = vmatpush1.msra.mxu0 0.0
          %566 = vmatprep.subr.mxu0 0.0
          %567 = vmatpush1.msra.mxu0 0.0
          %568 = vmatprep.subr.mxu0 0.0
          %569 = vmatpush1.msra.mxu0 0.0
          %570 = vmatprep.subr.mxu0 0.0
          %571 = vmatpush1.msra.mxu0 0.0
          %572 = vmatprep.subr.mxu0 0.0
          %573 = vmatpush1.msra.mxu0 0.0
          %574 = vmatprep.subr.mxu0 0.0
          %575 = vmatpush1.msra.mxu0 0.0
          %576 = vmatprep.subr.mxu0 0.0
          %577 = vmatpush1.msra.mxu0 0.0
          %578 = vmatprep.mubr.f32.mxu0 0.0
          %579 = vmatmul.mubr.f32.gmra.mrb[0].mxu0 %v512
          %v580 = vpop.f32.mrb[0].mxu0
          %v581 = vadd.f32 0.0, %v580
          %v582 = vpop.f32.mrb[0].mxu0
          %583 = vdwg.mxu0
          %v584 = vmax.f32 %v581, 0.0
          %vm585 = vcmask 15360
          %v587 = vsel %vm585, %v584, 0
          %vm589 = vcmask 1041408
          %v591 = vsel %vm589, %v435, 0
          %593 = vmatprep.subr.mxu0 0.0
          %594 = vmatpush1.msra.mxu0 %v591
          %595 = vmatprep.subr.mxu0 0.0
          %596 = vmatpush1.msra.mxu0 0.0
          %597 = vmatprep.subr.mxu0 0.0
          %598 = vmatpush1.msra.mxu0 0.0
          %599 = vmatprep.subr.mxu0 0.0
          %600 = vmatpush1.msra.mxu0 0.0
          %601 = vmatprep.subr.mxu0 0.0
          %602 = vmatpush1.msra.mxu0 0.0
          %603 = vmatprep.subr.mxu0 0.0
          %604 = vmatpush1.msra.mxu0 0.0
          %605 = vmatprep.subr.mxu0 0.0
          %606 = vmatpush1.msra.mxu0 0.0
          %607 = vmatprep.subr.mxu0 0.0
          %608 = vmatpush1.msra.mxu0 0.0
          %609 = vmatprep.subr.mxu0 0.0
          %610 = vmatpush1.msra.mxu0 0.0
          %611 = vmatprep.subr.mxu0 0.0
          %612 = vmatpush1.msra.mxu0 0.0
          %613 = vmatprep.subr.mxu0 0.0
          %614 = vmatpush1.msra.mxu0 0.0
          %615 = vmatprep.subr.mxu0 0.0
          %616 = vmatpush1.msra.mxu0 0.0
          %617 = vmatprep.subr.mxu0 0.0
          %618 = vmatpush1.msra.mxu0 0.0
          %619 = vmatprep.subr.mxu0 0.0
          %620 = vmatpush1.msra.mxu0 0.0
          %621 = vmatprep.subr.mxu0 0.0
          %622 = vmatpush1.msra.mxu0 0.0
          %623 = vmatprep.subr.mxu0 0.0
          %624 = vmatpush1.msra.mxu0 0.0
          %625 = vmatprep.subr.mxu0 0.0
          %626 = vmatpush1.msra.mxu0 0.0
          %627 = vmatprep.subr.mxu0 0.0
          %628 = vmatpush1.msra.mxu0 0.0
          %629 = vmatprep.subr.mxu0 0.0
          %630 = vmatpush1.msra.mxu0 0.0
          %631 = vmatprep.subr.mxu0 0.0
          %632 = vmatpush1.msra.mxu0 0.0
          %633 = vmatprep.subr.mxu0 0.0
          %634 = vmatpush1.msra.mxu0 0.0
          %635 = vmatprep.subr.mxu0 0.0
          %636 = vmatpush1.msra.mxu0 0.0
          %637 = vmatprep.subr.mxu0 0.0
          %638 = vmatpush1.msra.mxu0 0.0
          %639 = vmatprep.subr.mxu0 0.0
          %640 = vmatpush1.msra.mxu0 0.0
          %641 = vmatprep.subr.mxu0 0.0
          %642 = vmatpush1.msra.mxu0 0.0
          %643 = vmatprep.subr.mxu0 0.0
          %644 = vmatpush1.msra.mxu0 0.0
          %645 = vmatprep.subr.mxu0 0.0
          %646 = vmatpush1.msra.mxu0 0.0
          %647 = vmatprep.subr.mxu0 0.0
          %648 = vmatpush1.msra.mxu0 0.0
          %649 = vmatprep.subr.mxu0 0.0
          %650 = vmatpush1.msra.mxu0 0.0
          %651 = vmatprep.subr.mxu0 0.0
          %652 = vmatpush1.msra.mxu0 0.0
          %653 = vmatprep.subr.mxu0 0.0
          %654 = vmatpush1.msra.mxu0 0.0
          %655 = vmatprep.subr.mxu0 0.0
          %656 = vmatpush1.msra.mxu0 0.0
          %657 = vmatprep.mubr.f32.mxu0 0.0
          %658 = vmatmul.mubr.f32.gmra.mrb[0].mxu0 %v587
          %v659 = vpop.f32.mrb[0].mxu0
          %v660 = vadd.f32 0.0, %v659
          %v661 = vpop.f32.mrb[0].mxu0
          %662 = vdwg.mxu0
          %v664 = vsel %vm585, %v510, 0
          %666 = vmatprep.subr.mxu0 0.0
          %667 = vmatpush1.msra.mxu0 %v591
          %668 = vmatprep.subr.mxu0 0.0
          %669 = vmatpush1.msra.mxu0 0.0
          %670 = vmatprep.subr.mxu0 0.0
          %671 = vmatpush1.msra.mxu0 0.0
          %672 = vmatprep.subr.mxu0 0.0
          %673 = vmatpush1.msra.mxu0 0.0
          %674 = vmatprep.subr.mxu0 0.0
          %675 = vmatpush1.msra.mxu0 0.0
          %676 = vmatprep.subr.mxu0 0.0
          %677 = vmatpush1.msra.mxu0 0.0
          %678 = vmatprep.subr.mxu0 0.0
          %679 = vmatpush1.msra.mxu0 0.0
          %680 = vmatprep.subr.mxu0 0.0
          %681 = vmatpush1.msra.mxu0 0.0
          %682 = vmatprep.subr.mxu0 0.0
          %683 = vmatpush1.msra.mxu0 0.0
          %684 = vmatprep.subr.mxu0 0.0
          %685 = vmatpush1.msra.mxu0 0.0
          %686 = vmatprep.subr.mxu0 0.0
          %687 = vmatpush1.msra.mxu0 0.0
          %688 = vmatprep.subr.mxu0 0.0
          %689 = vmatpush1.msra.mxu0 0.0
          %690 = vmatprep.subr.mxu0 0.0
          %691 = vmatpush1.msra.mxu0 0.0
          %692 = vmatprep.subr.mxu0 0.0
          %693 = vmatpush1.msra.mxu0 0.0
          %694 = vmatprep.subr.mxu0 0.0
          %695 = vmatpush1.msra.mxu0 0.0
          %696 = vmatprep.subr.mxu0 0.0
          %697 = vmatpush1.msra.mxu0 0.0
          %698 = vmatprep.subr.mxu0 0.0
          %699 = vmatpush1.msra.mxu0 0.0
          %700 = vmatprep.subr.mxu0 0.0
          %701 = vmatpush1.msra.mxu0 0.0
          %702 = vmatprep.subr.mxu0 0.0
          %703 = vmatpush1.msra.mxu0 0.0
          %704 = vmatprep.subr.mxu0 0.0
          %705 = vmatpush1.msra.mxu0 0.0
          %706 = vmatprep.subr.mxu0 0.0
          %707 = vmatpush1.msra.mxu0 0.0
          %708 = vmatprep.subr.mxu0 0.0
          %709 = vmatpush1.msra.mxu0 0.0
          %710 = vmatprep.subr.mxu0 0.0
          %711 = vmatpush1.msra.mxu0 0.0
          %712 = vmatprep.subr.mxu0 0.0
          %713 = vmatpush1.msra.mxu0 0.0
          %714 = vmatprep.subr.mxu0 0.0
          %715 = vmatpush1.msra.mxu0 0.0
          %716 = vmatprep.subr.mxu0 0.0
          %717 = vmatpush1.msra.mxu0 0.0
          %718 = vmatprep.subr.mxu0 0.0
          %719 = vmatpush1.msra.mxu0 0.0
          %720 = vmatprep.subr.mxu0 0.0
          %721 = vmatpush1.msra.mxu0 0.0
          %722 = vmatprep.subr.mxu0 0.0
          %723 = vmatpush1.msra.mxu0 0.0
          %724 = vmatprep.subr.mxu0 0.0
          %725 = vmatpush1.msra.mxu0 0.0
          %726 = vmatprep.subr.mxu0 0.0
          %727 = vmatpush1.msra.mxu0 0.0
          %728 = vmatprep.subr.mxu0 0.0
          %729 = vmatpush1.msra.mxu0 0.0
          %730 = vmatprep.mubr.f32.mxu0 0.0
          %731 = vmatmul.mubr.f32.gmra.mrb[0].mxu0 %v664
          %v732 = vpop.f32.mrb[0].mxu0
          %v733 = vadd.f32 %v660, %v732
          %v734 = vpop.f32.mrb[0].mxu0
          %735 = vdwg.mxu0
          %v736 = vsub.f32 0.0, %v733
          %v737 = vmul.f32 %v736, 1.442695
          %v738 = vpow.pop %v737
          %v739 = vadd.f32 %v738, 1.0
          %v740 = vrcp.pop %v739
          %v741 = vmul.f32 1.0, %v740
          %742 = vst.msk [vmem:[%s185] sm:$0x1] %vm316, %v741
        $region40: #{channel_attention_forward.1} parent=31 // pred_fallthru
          _
        %s743 = sand.u32 %s107, 1
        %s744 = scalar_lea.sflag [#allocation5], %s743
        %s745 = sand.u32 %s107, 1
        %s746 = scalar_lea.vmem [#allocation4], %s745
        // Predicated region
        $region41: #{channel_attention_forward.1} parent=31 // pred_check
          %p747 = pneg %p117
        $region42: #{channel_attention_forward.1} parent=31 // pred_check_branch
          %749 = sbr.rel (%p747) target = $region44
        $region43: #{channel_attention_forward.1} parent=31 // pred_region
          %s751 = ssub.s32 16, 16
          %752 = vsyncadd %s744, %s751
          %s753 = smul.addr %s21, 16
          %s754 = scalar_lea.hbm %s3, %s753
          %s756 = sshll.u32 %s746, 4
          %s757 = int_to_ptr.vmem [resolvable:$true] %s756
          %759 = dma.vmem_to_hbm [thread:$0]  %s757, 16, %s754, %s744
        $region44: #{channel_attention_forward.1} parent=31 // pred_fallthru
          _
      $region32: #{channel_attention_forward.1} parent=5 // pred_fallthru
        _
      %p760 = scmp.le.s32.totalorder 2, %s12
      // Predicated region
      $region45: #{channel_attention_forward.1} parent=5 // pred_check
        %p761 = pneg %p760
      $region46: #{channel_attention_forward.1} parent=5 // pred_check_branch
        %763 = sbr.rel (%p761) target = $region48
      $region47: #{channel_attention_forward.1} parent=5 // pred_region
        %s764 = ssub.s32 %s12, 2
        // Predicated region
        $region49: #{channel_attention_forward.1} parent=47 // pred_check
          %p765 = pneg %p123
        $region50: #{channel_attention_forward.1} parent=47 // pred_check_branch
          %767 = sbr.rel (%p765) target = $region52
        $region51: #{channel_attention_forward.1} parent=47 // pred_region
          %s768 = sand.u32 %s108, 1
          %s769 = scalar_lea.sflag [#allocation5], %s768
          %s770 = sand.u32 %s108, 1
          %s771 = scalar_lea.vmem [#allocation4], %s770
          %772 = dma.done %s769, 16
        $region52: #{channel_attention_forward.1} parent=47 // pred_fallthru
          _
      $region48: #{channel_attention_forward.1} parent=5 // pred_fallthru
        _
    $region6: #{channel_attention_forward.1} parent=1 // loop_footer
      %s16 = sadd.s32 1, %s12
    $region7: #{channel_attention_forward.1} parent=1 // loop_footer_branch
      %11 = sbr.rel target = $region3
    $region8: #{channel_attention_forward.1} parent=1 // loop_exit
      _
    %773 = vsyncpa [#allocation5], 1
    %s774 = scalar_lea.sflag [#allocation5], 1
    %775 = vsyncpa %s774, 1

</llo_original>
